<compile_context>
chip_gen: v6e
topology: v6e:2x2x1
jax: 0.10.0
libtpu: 0.0.40
codegen_flags: <defaults>
</compile_context>

<pallas_src>
import functools

import jax
import jax.numpy as jnp
from jax.experimental import pallas as pl
from jax.experimental.pallas import tpu as pltpu


def _round_up(a: int, b: int) -> int:
    return ((a + b - 1) // b) * b


# ----------------------------------------------------------------------------
# Generation-aware defaults (tile sizes, output alignment, VMEM limit).
# ----------------------------------------------------------------------------
def _tpu_defaults():
    kind = ""
    try:
        kind = jax.devices()[0].device_kind.lower()
    except Exception:
        pass

    vmem_cap = None
    try:
        info = pltpu.get_tpu_info()
        vmem_cap = getattr(info, "vmem_capacity_bytes", None)
    except Exception:
        vmem_cap = None

    if "v7" in kind:
        # 64 MiB VMEM / TC, 2 TCs, 2x256x256 MXU.
        tm, th, out_align, vmem_target, want_two_tiles = 512, 256, 256, 56 << 20, True
    elif "v6" in kind:
        # 128 MiB VMEM, 2x256x256 MXU, ~656 FLOP/B balance point.
        tm, th, out_align, vmem_target, want_two_tiles = 512, 1024, 256, 100 << 20, False
    elif "v5" in kind or "lite" in kind:
        # 128 MiB VMEM, 4x128x128 MXU, ~240 FLOP/B balance point.
        tm, th, out_align, vmem_target, want_two_tiles = 256, 512, 128, 64 << 20, False
    else:
        # Unknown generation: conservative settings that run everywhere.
        tm, th, out_align, vmem_target, want_two_tiles = 256, 512, 128, 64 << 20, False

    if vmem_cap:
        vmem_target = min(vmem_target, int(vmem_cap * 0.85))

    return dict(tm=tm, th=th, out_align=out_align,
                vmem_limit_bytes=vmem_target, want_two_tiles=want_two_tiles)


# ----------------------------------------------------------------------------
# Kernel body: one (token-tile, hidden-chunk) step of the fused forward.
# ----------------------------------------------------------------------------
def _expert_kernel(x_ref, w1_ref, w2_ref, w3_ref, o_ref, acc_ref):
    """
    x_ref   : (tm, in)        VMEM, compute dtype (bf16)
    w1_ref  : (in, th)        VMEM, K-major layer1.weight chunk
    w2_ref  : (th, out_pad)   VMEM, K-major layer2.weight chunk
    w3_ref  : (in, th)        VMEM, K-major layer3.weight chunk
    o_ref   : (tm, out_pad)   VMEM, output dtype
    acc_ref : (tm, out_pad)   VMEM, f32 accumulator (persists across hidden axis)
    """
    h = pl.program_id(1)

    @pl.when(h == 0)
    def _init():
        acc_ref[...] = jnp.zeros_like(acc_ref)

    x = x_ref[...]

    # h1 = x @ W1_chunk ; h3 = x @ W3_chunk   (MXU, f32 accumulation, canonical K-major)
    h1 = jnp.dot(x, w1_ref[...], preferred_element_type=jnp.float32)
    h3 = jnp.dot(x, w3_ref[...], preferred_element_type=jnp.float32)

    # SiLU(h1) * h3   (VPU; sigmoid -> EUP)
    gated = (h1 * jax.nn.sigmoid(h1)) * h3

    # Partial y += gated @ W2_chunk   (MXU, f32 accumulator)
    acc_ref[...] += jnp.dot(gated.astype(x.dtype), w2_ref[...],
                            preferred_element_type=jnp.float32)

    @pl.when(h == pl.num_programs(1) - 1)
    def _finalize():
        y = acc_ref[...]
        # act2 = SiLU; dropout is identity in eval mode.
        # TODO(synk): training-mode dropout would use pltpu.prng_seed +
        # pltpu.prng_random_bits to build a keep-mask and rescale by 1/(1-p).
        o_ref[...] = (y * jax.nn.sigmoid(y)).astype(o_ref.dtype)


# ----------------------------------------------------------------------------
# One-time weight preparation (hoisted out of the per-call path):
#   cast to bf16, transpose to K-major, zero-pad hidden / out dims.
# ----------------------------------------------------------------------------
def prepare_expert_weights(w1, w2, w3, *, block_h=None, out_align=None,
                           compute_dtype=jnp.bfloat16):
    """
    w1 : [hidden, in]   (PyTorch layer1.weight)
    w2 : [out, hidden]  (PyTorch layer2.weight)
    w3 : [hidden, in]   (PyTorch layer3.weight)
    """
    cfg = _tpu_defaults()
    block_h = block_h if block_h is not None else cfg["th"]
    out_align = out_align if out_align is not None else cfg["out_align"]
    assert out_align % 128 == 0

    hidden, in_features = w1.shape
    out_features = w2.shape[0]

    if hidden <= block_h:
        th, hid_pad = hidden, hidden               # single hidden chunk
    else:
        assert block_h % 128 == 0, "hidden chunk must be a multiple of 128 (lane)"
        th = block_h
        hid_pad = _round_up(hidden, th)

    out_pad = _round_up(out_features, out_align)   # lane-dense MXU-filling stores

    # K-major layouts: w1t/w3t = (in, hid_pad), w2t = (hid_pad, out_pad).
    w1t = jnp.pad(w1.astype(compute_dtype).T, ((0, 0), (0, hid_pad - hidden)))
    w3t = jnp.pad(w3.astype(compute_dtype).T, ((0, 0), (0, hid_pad - hidden)))
    w2t = jnp.pad(w2.astype(compute_dtype).T,
                  ((0, hid_pad - hidden), (0, out_pad - out_features)))

    return dict(w1t=w1t, w2t=w2t, w3t=w3t,
                in_features=in_features, hidden=hidden, out_features=out_features,
                th=th, hid_pad=hid_pad, out_pad=out_pad,
                compute_dtype=compute_dtype)


# ----------------------------------------------------------------------------
# Forward pass on prepared weights.
# ----------------------------------------------------------------------------
@functools.partial(jax.jit, static_argnames=(
    "out_features", "th", "tm", "vmem_limit_bytes", "want_two_tiles", "compute_dtype"))
def _expert_forward_impl(x, w1t, w2t, w3t, *, out_features, th, tm,
                         vmem_limit_bytes, want_two_tiles, compute_dtype):
    n_tokens, in_features = x.shape
    hid_pad = w1t.shape[1]
    out_pad = w2t.shape[1]
    out_dtype = x.dtype

    # ---- token-tile geometry (bf16 min tile is (16,128) -> multiples of 16) ----
    assert tm % 16 == 0, "token tile must be a multiple of 16 (bf16 sublane packing)"
    n16 = _round_up(max(n_tokens, 16), 16)
    tm_eff = min(tm, n16)
    if want_two_tiles and n16 > 16:
        # Keep >= 2 "parallel" token tiles so the second v7x TensorCore is busy.
        tm_eff = min(tm_eff, _round_up((n16 + 1) // 2, 16))
    n_pad = _round_up(n_tokens, tm_eff)

    xc = x.astype(compute_dtype)
    if n_pad != n_tokens:
        xc = jnp.pad(xc, ((0, n_pad - n_tokens), (0, 0)))   # zero tokens are neutral

    grid = (n_pad // tm_eff, hid_pad // th)
    g0 = grid[0]

    # ---- cost hint: weights are re-streamed once per token tile ----
    cbytes = jnp.dtype(compute_dtype).itemsize
    obytes = jnp.dtype(out_dtype).itemsize
    cost = pl.CostEstimate(
        flops=2 * n_pad * in_features * hid_pad * 2 + 2 * n_pad * hid_pad * out_pad,
        transcendentals=n_pad * hid_pad + n_pad * out_pad,
        bytes_accessed=cbytes * (n_pad * in_features
                                 + g0 * (2 * hid_pad * in_features
                                         + hid_pad * out_pad))
                       + obytes * n_pad * out_pad,
    )

    out_padded = pl.pallas_call(
        _expert_kernel,
        out_shape=jax.ShapeDtypeStruct((n_pad, out_pad), out_dtype),
        grid_spec=pltpu.PrefetchScalarGridSpec(
            num_scalar_prefetch=0,
            grid=grid,
            in_specs=[
                pl.BlockSpec((tm_eff, in_features), lambda i, h: (i, 0)),  # x tile
                pl.BlockSpec((in_features, th),     lambda i, h: (0, h)),  # W1 chunk
                pl.BlockSpec((th, out_pad),         lambda i, h: (h, 0)),  # W2 chunk
                pl.BlockSpec((in_features, th),     lambda i, h: (0, h)),  # W3 chunk
            ],
            out_specs=pl.BlockSpec((tm_eff, out_pad), lambda i, h: (i, 0)),
            scratch_shapes=[pltpu.VMEM((tm_eff, out_pad), jnp.float32)],
        ),
        compiler_params=pltpu.CompilerParams(
            dimension_semantics=("parallel", "arbitrary"),
            vmem_limit_bytes=vmem_limit_bytes,
        ),
        cost_estimate=cost,
    )(xc, w1t, w2t, w3t)

    return out_padded[:n_tokens, :out_features]


def expert_forward_prepared(x, prep, *, tm=None):
    """x: [n_tokens, in_features]; prep: output of prepare_expert_weights."""
    cfg = _tpu_defaults()
    tm = tm if tm is not None else cfg["tm"]
    return _expert_forward_impl(
        x, prep["w1t"], prep["w2t"], prep["w3t"],
        out_features=prep["out_features"], th=prep["th"], tm=tm,
        vmem_limit_bytes=cfg["vmem_limit_bytes"],
        want_two_tiles=cfg["want_two_tiles"],
        compute_dtype=prep["compute_dtype"])


def expert_forward(x, w1, w2, w3, *, tm=None, block_h=None, out_align=None,
                   compute_dtype=jnp.bfloat16):
    """Convenience path matching the PyTorch module signature (weights in
    (out, in) layout). Production code should call prepare_expert_weights once
    at load time and reuse the prepared weights per call."""
    prep = prepare_expert_weights(w1, w2, w3, block_h=block_h,
                                  out_align=out_align, compute_dtype=compute_dtype)
    return expert_forward_prepared(x, prep, tm=tm)


# ----------------------------------------------------------------------------
# References.
# ----------------------------------------------------------------------------
def expert_reference_f32(x, w1, w2, w3):
    """Pure-JAX f32 reference matching the PyTorch module (eval mode)."""
    h1 = x @ w1.T
    h1 = h1 * jax.nn.sigmoid(h1)
    h3 = x @ w3.T
    y = (h1 * h3) @ w2.T
    return y * jax.nn.sigmoid(y)


def expert_reference_mixed(x, w1, w2, w3, compute_dtype=jnp.bfloat16):
    """Reference mirroring the kernel's bf16-operand / f32-accumulate casts."""
    xc = x.astype(compute_dtype)
    h1 = jnp.dot(xc, w1.astype(compute_dtype).T, preferred_element_type=jnp.float32)
    h3 = jnp.dot(xc, w3.astype(compute_dtype).T, preferred_element_type=jnp.float32)
    gated = (h1 * jax.nn.sigmoid(h1)) * h3
    y = jnp.dot(gated.astype(compute_dtype), w2.astype(compute_dtype).T,
                preferred_element_type=jnp.float32)
    return (y * jax.nn.sigmoid(y)).astype(x.dtype)


if __name__ == "__main__":
    # Small shapes consistent with the module; sized to exercise token padding,
    # hidden-chunk accumulation (2 chunks) and lane-dense output padding.
    in_features, hidden_dim, out_features = 64, 192, 64
    n_tokens = 50

    key = jax.random.PRNGKey(0)
    kx, k1, k2, k3 = jax.random.split(key, 4)

    x = jax.random.normal(kx, (n_tokens, in_features), dtype=jnp.float32)
    # Deterministic "Linear(bias=False)" weights in PyTorch (out, in) layout.
    w1 = jax.random.normal(k1, (hidden_dim, in_features), dtype=jnp.float32) * 0.1
    w2 = jax.random.normal(k2, (out_features, hidden_dim), dtype=jnp.float32) * 0.1
    w3 = jax.random.normal(k3, (hidden_dim, in_features), dtype=jnp.float32) * 0.1

    # One-time weight prep (cast/pad/transpose hoisted out of the per-call path).
    # Small block_h / tm so the demo actually runs a (2 x 2) grid.
    prep = prepare_expert_weights(w1, w2, w3, block_h=128, out_align=128)
    out = expert_forward_prepared(x, prep, tm=32)
    out = jax.block_until_ready(out)
    assert out.shape == (n_tokens, out_features)

    # Tight check against a reference that mirrors the kernel's bf16 casts.
    ref_mixed = expert_reference_mixed(x, w1, w2, w3)
    assert jnp.allclose(out, ref_mixed, atol=2e-3, rtol=2e-3), \
        "mismatch vs mixed-precision reference"

    # Loose sanity check against the full-f32 PyTorch-faithful reference.
    ref_f32 = expert_reference_f32(x, w1, w2, w3)
    assert jnp.allclose(out, ref_f32, atol=5e-2, rtol=5e-2), \
        "mismatch vs f32 reference"

    print("KERNEL_OK")
</pallas_src>

<mosaic_0001>
module attributes {stable_mosaic.version = 11 : i64} {
  func.func @_expert_kernel(%arg0: i32, %arg1: i32, %arg2: memref<32x64xbf16, #tpu.memory_space<vmem>>, %arg3: memref<64x128xbf16, #tpu.memory_space<vmem>>, %arg4: memref<128x128xbf16, #tpu.memory_space<vmem>>, %arg5: memref<64x128xbf16, #tpu.memory_space<vmem>>, %arg6: memref<32x128xf32, #tpu.memory_space<vmem>>, %arg7: memref<32x128xf32, #tpu.memory_space<vmem>>) attributes {dimension_semantics = [#tpu.dimension_semantics<parallel>, #tpu.dimension_semantics<arbitrary>], iteration_bounds = array<i64: 2, 2>, scalar_prefetch = 0 : i64, scratch_operands = 1 : i64, tpu.core_type = #tpu.core_type<tc>, window_params = [{transform_indices = @transform_0, window_bounds = array<i64: 32, 64>}, {transform_indices = @transform_1, window_bounds = array<i64: 64, 128>}, {transform_indices = @transform_2, window_bounds = array<i64: 128, 128>}, {transform_indices = @transform_3, window_bounds = array<i64: 64, 128>}, {transform_indices = @transform_4, window_bounds = array<i64: 32, 128>}]} {
    %c0_i32 = arith.constant 0 : i32
    %0 = arith.cmpi eq, %arg1, %c0_i32 : i32
    %1 = arith.extui %0 : i1 to i32
    %c0_i32_0 = arith.constant 0 : i32
    %2 = arith.cmpi ne, %1, %c0_i32_0 : i32
    scf.if %2 {
      %cst_16 = arith.constant 0.000000e+00 : f32
      %24 = vector.broadcast %cst_16 : f32 to vector<32x128xf32>
      %c0_17 = arith.constant 0 : index
      %c0_18 = arith.constant 0 : index
      %25 = vector.load %arg7[%c0_17, %c0_18] : memref<32x128xf32, #tpu.memory_space<vmem>>, vector<32x128xf32>
      tpu.vector_store %arg7[%c0_17, %c0_18], %24 {strides = array<i32>} : memref<32x128xf32, #tpu.memory_space<vmem>>, vector<32x128xf32>,
    } else {
    }
    %c0 = arith.constant 0 : index
    %c0_1 = arith.constant 0 : index
    %3 = vector.load %arg2[%c0, %c0_1] : memref<32x64xbf16, #tpu.memory_space<vmem>>, vector<32x64xbf16>
    %c0_2 = arith.constant 0 : index
    %c0_3 = arith.constant 0 : index
    %4 = vector.load %arg3[%c0_2, %c0_3] : memref<64x128xbf16, #tpu.memory_space<vmem>>, vector<64x128xbf16>
    %cst = arith.constant dense<0.000000e+00> : vector<32x128xf32>
    %5 = tpu.matmul %3, %4, %cst {dimension_numbers = #tpu.dot_dimension_numbers<[1], [0], [0], [1], [0, 0, 1, 1], [], []>} : vector<32x64xbf16>, vector<64x128xbf16>, vector<32x128xf32> -> vector<32x128xf32>
    %c0_4 = arith.constant 0 : index
    %c0_5 = arith.constant 0 : index
    %6 = vector.load %arg5[%c0_4, %c0_5] : memref<64x128xbf16, #tpu.memory_space<vmem>>, vector<64x128xbf16>
    %cst_6 = arith.constant dense<0.000000e+00> : vector<32x128xf32>
    %7 = tpu.matmul %3, %6, %cst_6 {dimension_numbers = #tpu.dot_dimension_numbers<[1], [0], [0], [1], [0, 0, 1, 1], [], []>} : vector<32x64xbf16>, vector<64x128xbf16>, vector<32x128xf32> -> vector<32x128xf32>
    %8 = arith.negf %5 : vector<32x128xf32>
    %9 = math.exp %8 : vector<32x128xf32>
    %cst_7 = arith.constant 1.000000e+00 : f32
    %10 = vector.broadcast %cst_7 : f32 to vector<32x128xf32>
    %11 = arith.addf %10, %9 : vector<32x128xf32>
    %12 = arith.divf %10, %11 : vector<32x128xf32>
    %13 = arith.mulf %5, %12 : vector<32x128xf32>
    %14 = arith.mulf %13, %7 : vector<32x128xf32>
    %c0_8 = arith.constant 0 : index
    %c0_9 = arith.constant 0 : index
    %15 = vector.load %arg7[%c0_8, %c0_9] : memref<32x128xf32, #tpu.memory_space<vmem>>, vector<32x128xf32>
    %16 = arith.truncf %14 : vector<32x128xf32> to vector<32x128xbf16>
    %c0_10 = arith.constant 0 : index
    %c0_11 = arith.constant 0 : index
    %17 = vector.load %arg4[%c0_10, %c0_11] : memref<128x128xbf16, #tpu.memory_space<vmem>>, vector<128x128xbf16>
    %cst_12 = arith.constant dense<0.000000e+00> : vector<32x128xf32>
    %18 = tpu.matmul %16, %17, %cst_12 {dimension_numbers = #tpu.dot_dimension_numbers<[1], [0], [0], [1], [0, 0, 1, 1], [], []>} : vector<32x128xbf16>, vector<128x128xbf16>, vector<32x128xf32> -> vector<32x128xf32>
    %19 = arith.addf %15, %18 : vector<32x128xf32>
    %c0_13 = arith.constant 0 : index
    %c0_14 = arith.constant 0 : index
    %20 = vector.load %arg7[%c0_13, %c0_14] : memref<32x128xf32, #tpu.memory_space<vmem>>, vector<32x128xf32>
    tpu.vector_store %arg7[%c0_13, %c0_14], %19 {strides = array<i32>} : memref<32x128xf32, #tpu.memory_space<vmem>>, vector<32x128xf32>,
    %c1_i32 = arith.constant 1 : i32
    %21 = arith.cmpi eq, %arg1, %c1_i32 : i32
    %22 = arith.extui %21 : i1 to i32
    %c0_i32_15 = arith.constant 0 : i32
    %23 = arith.cmpi ne, %22, %c0_i32_15 : i32
    scf.if %23 {
      %c0_16 = arith.constant 0 : index
      %c0_17 = arith.constant 0 : index
      %24 = vector.load %arg7[%c0_16, %c0_17] : memref<32x128xf32, #tpu.memory_space<vmem>>, vector<32x128xf32>
      %25 = arith.negf %24 : vector<32x128xf32>
      %26 = math.exp %25 : vector<32x128xf32>
      %cst_18 = arith.constant 1.000000e+00 : f32
      %27 = vector.broadcast %cst_18 : f32 to vector<32x128xf32>
      %28 = arith.addf %27, %26 : vector<32x128xf32>
      %29 = arith.divf %27, %28 : vector<32x128xf32>
      %30 = arith.mulf %24, %29 : vector<32x128xf32>
      %c0_19 = arith.constant 0 : index
      %c0_20 = arith.constant 0 : index
      %31 = vector.load %arg6[%c0_19, %c0_20] : memref<32x128xf32, #tpu.memory_space<vmem>>, vector<32x128xf32>
      tpu.vector_store %arg6[%c0_19, %c0_20], %30 {strides = array<i32>} : memref<32x128xf32, #tpu.memory_space<vmem>>, vector<32x128xf32>,
    } else {
    }
    return
  }
  func.func @transform_0(%arg0: i32, %arg1: i32) -> (i32, i32) {
    %c0_i32 = arith.constant 0 : i32
    %c0_i32_0 = arith.constant 0 : i32
    return %arg0, %c0_i32 : i32, i32
  }
  func.func @transform_1(%arg0: i32, %arg1: i32) -> (i32, i32) {
    %c0_i32 = arith.constant 0 : i32
    %c0_i32_0 = arith.constant 0 : i32
    return %c0_i32, %arg1 : i32, i32
  }
  func.func @transform_2(%arg0: i32, %arg1: i32) -> (i32, i32) {
    %c0_i32 = arith.constant 0 : i32
    %c0_i32_0 = arith.constant 0 : i32
    return %arg1, %c0_i32 : i32, i32
  }
  func.func @transform_3(%arg0: i32, %arg1: i32) -> (i32, i32) {
    %c0_i32 = arith.constant 0 : i32
    %c0_i32_0 = arith.constant 0 : i32
    return %c0_i32, %arg1 : i32, i32
  }
  func.func @transform_4(%arg0: i32, %arg1: i32) -> (i32, i32) {
    %c0_i32 = arith.constant 0 : i32
    %c0_i32_0 = arith.constant 0 : i32
    return %arg0, %c0_i32 : i32, i32
  }
}

</mosaic_0001>

<llo_original>
// kernel: _expert_forward_impl.1
$region0: #{_expert_forward_impl.1}
  #allocation0 [shape = 'u32[]', space=smem, size = 0x4, offset = 0x4, fixed_abs, tag = 'smem constant byte address 0x4 - core index']
  #allocation1 [shape = 'u32[144,128]{1,0:T(1,128)}', space=vmem, size = 0x12000, scoped, tag = 'internal scratch']
  #allocation2 [shape = 'f32[32,128]{1,0:T(8,128)}', space=vmem, size = 0x4000, scoped, tag = 'scratch operand']
  %s0 = inlined_call_operand.vmem [shape: bf16[64,64], index: 0, kind: input, shape index: {}]
  %s1 = inlined_call_operand.hbm [shape: bf16[64,256], index: 1, kind: input, shape index: {}]
  %s2 = inlined_call_operand.vmem [shape: bf16[256,128], index: 2, kind: input, shape index: {}]
  %s3 = inlined_call_operand.hbm [shape: bf16[64,256], index: 3, kind: input, shape index: {}]
  %s4 = inlined_call_operand.vmem [shape: f32[64,128], index: 4, kind: output, shape index: {}]
  %s5 = sld [smem:[#allocation0]]
  $region65: #{_expert_forward_impl.1} parent=0
    _
  %s7 = ssub.s32 1, %s5
  %s8 = scalar_select 0, %s7, %s5
  $region1: #{_expert_forward_impl.1} parent=0
    #allocation3 [shape = 'u8[32768]{0}', space=vmem, size = 0x8000, scoped, tag = 'input window, operand 1']
    #allocation4 [shape = 's32[2]{0}', space=sflag, size = 0x8, scoped, tag = 'scoped memory for _expert_forward_impl.1']
    #allocation5 [shape = 'u8[32768]{0}', space=vmem, size = 0x8000, scoped, tag = 'input window, operand 3']
    #allocation6 [shape = 's32[2]{0}', space=sflag, size = 0x8, scoped, tag = 'scoped memory for _expert_forward_impl.1']
    %9 = vsyncpa [#allocation4], 0
    %s10 = scalar_lea.sflag [#allocation4], 1
    %11 = vsyncpa %s10, 0
    %12 = vsyncpa [#allocation6], 0
    %s13 = scalar_lea.sflag [#allocation6], 1
    %14 = vsyncpa %s13, 0
    loop: start=0, step=1, limit=6
    $region2: #{_expert_forward_impl.1} parent=1 // loop_pre_header
      _
    $region3: #{_expert_forward_impl.1} parent=1 // loop_header
      %s16 = sphi 0, %s20
      %p17 = scmp.ge.s32.totalorder %s16, 6
      %s23 = sphi 0, %s35
      %s24 = sphi 0, %s31
      %s25 = sphi 0, %s23
      %s26 = sphi 0, %s24
      %s27 = sphi 0, %s25
      %s28 = sphi 0, %s26
      %s38 = sphi 0, %s40
      %s41 = sphi 0, %s38
      %s42 = sphi 0, %s41
      %s58 = sphi 0, %s42
      %s64 = sphi 0, %s66
      %s67 = sphi 0, %s64
      %s68 = sphi 0, %s67
      %s84 = sphi 0, %s68
      %s90 = sphi 0, %s92
      %s93 = sphi 0, %s90
      %s94 = sphi 0, %s93
      %s110 = sphi 0, %s94
      %s116 = sphi 0, %s118
      %s119 = sphi 0, %s116
      %s120 = sphi 0, %s119
      %s136 = sphi 0, %s120
      %s142 = sphi 0, %s144
      %s145 = sphi 0, %s142
      %s146 = sphi 0, %s145
      %s162 = sphi 0, %s146
    $region4: #{_expert_forward_impl.1} parent=1 // loop_header_branch
      %19 = sbr.rel (%p17) target = $region8
    $region5: #{_expert_forward_impl.1} parent=1 // loop_body
      %s21 = ssub.s32 %s16, 1
      %s22 = ssub.s32 %s16, 2
      %s29 = sadd.s32 1, %s24
      %p30 = scmp.ge.s32.totalorder %s29, 2
      %s31 = scalar_select %p30, 0, %s29
      %s32 = sadd.s32 1, %s23
      %s33 = scalar_select %p30, %s32, %s23
      %p34 = scmp.ge.s32.totalorder %s33, 2
      %s35 = scalar_select %p34, 0, %s33
      %s36 = ssub.s32 %s23, %s35
      %p37 = scmp.eq.s32.totalorder %s36, 0
      %s39 = sadd.s32 %s38, 1
      %s40 = scalar_select %p37, %s38, %s39
      %p43 = pneg %p37
      %p44 = scmp.eq.s32.totalorder %s16, 3
      %p45 = por %p43, %p44
      %p46 = scmp.ne.s32.totalorder %s38, %s41
      %p47 = scmp.eq.s32.totalorder %s16, 0
      %p48 = por %p46, %p47
      %p49 = scmp.ne.s32.totalorder %s38, %s41
      %p50 = scmp.eq.s32.totalorder %s21, 3
      %p51 = por %p49, %p50
      %p52 = scmp.ne.s32.totalorder %s41, %s42
      %p53 = scmp.eq.s32.totalorder %s21, 0
      %p54 = por %p52, %p53
      %p55 = scmp.ne.s32.totalorder %s41, %s42
      %p56 = scmp.eq.s32.totalorder %s22, 3
      %p57 = por %p55, %p56
      %p59 = scmp.ne.s32.totalorder %s42, %s58
      %p60 = scmp.eq.s32.totalorder %s22, 0
      %p61 = por %p59, %p60
      %s62 = ssub.s32 %s24, %s31
      %p63 = scmp.eq.s32.totalorder %s62, 0
      %s65 = sadd.s32 %s64, 1
      %s66 = scalar_select %p63, %s64, %s65
      %p69 = pneg %p63
      %p70 = scmp.eq.s32.totalorder %s16, 3
      %p71 = por %p69, %p70
      %p72 = scmp.ne.s32.totalorder %s64, %s67
      %p73 = scmp.eq.s32.totalorder %s16, 0
      %p74 = por %p72, %p73
      %p75 = scmp.ne.s32.totalorder %s64, %s67
      %p76 = scmp.eq.s32.totalorder %s21, 3
      %p77 = por %p75, %p76
      %p78 = scmp.ne.s32.totalorder %s67, %s68
      %p79 = scmp.eq.s32.totalorder %s21, 0
      %p80 = por %p78, %p79
      %p81 = scmp.ne.s32.totalorder %s67, %s68
      %p82 = scmp.eq.s32.totalorder %s22, 3
      %p83 = por %p81, %p82
      %p85 = scmp.ne.s32.totalorder %s68, %s84
      %p86 = scmp.eq.s32.totalorder %s22, 0
      %p87 = por %p85, %p86
      %s88 = ssub.s32 %s24, %s31
      %p89 = scmp.eq.s32.totalorder %s88, 0
      %s91 = sadd.s32 %s90, 1
      %s92 = scalar_select %p89, %s90, %s91
      %p95 = pneg %p89
      %p96 = scmp.eq.s32.totalorder %s16, 3
      %p97 = por %p95, %p96
      %p98 = scmp.ne.s32.totalorder %s90, %s93
      %p99 = scmp.eq.s32.totalorder %s16, 0
      %p100 = por %p98, %p99
      %p101 = scmp.ne.s32.totalorder %s90, %s93
      %p102 = scmp.eq.s32.totalorder %s21, 3
      %p103 = por %p101, %p102
      %p104 = scmp.ne.s32.totalorder %s93, %s94
      %p105 = scmp.eq.s32.totalorder %s21, 0
      %p106 = por %p104, %p105
      %p107 = scmp.ne.s32.totalorder %s93, %s94
      %p108 = scmp.eq.s32.totalorder %s22, 3
      %p109 = por %p107, %p108
      %p111 = scmp.ne.s32.totalorder %s94, %s110
      %p112 = scmp.eq.s32.totalorder %s22, 0
      %p113 = por %p111, %p112
      %s114 = ssub.s32 %s24, %s31
      %p115 = scmp.eq.s32.totalorder %s114, 0
      %s117 = sadd.s32 %s116, 1
      %s118 = scalar_select %p115, %s116, %s117
      %p121 = pneg %p115
      %p122 = scmp.eq.s32.totalorder %s16, 3
      %p123 = por %p121, %p122
      %p124 = scmp.ne.s32.totalorder %s116, %s119
      %p125 = scmp.eq.s32.totalorder %s16, 0
      %p126 = por %p124, %p125
      %p127 = scmp.ne.s32.totalorder %s116, %s119
      %p128 = scmp.eq.s32.totalorder %s21, 3
      %p129 = por %p127, %p128
      %p130 = scmp.ne.s32.totalorder %s119, %s120
      %p131 = scmp.eq.s32.totalorder %s21, 0
      %p132 = por %p130, %p131
      %p133 = scmp.ne.s32.totalorder %s119, %s120
      %p134 = scmp.eq.s32.totalorder %s22, 3
      %p135 = por %p133, %p134
      %p137 = scmp.ne.s32.totalorder %s120, %s136
      %p138 = scmp.eq.s32.totalorder %s22, 0
      %p139 = por %p137, %p138
      %s140 = ssub.s32 %s23, %s35
      %p141 = scmp.eq.s32.totalorder %s140, 0
      %s143 = sadd.s32 %s142, 1
      %s144 = scalar_select %p141, %s142, %s143
      %p147 = pneg %p141
      %p148 = scmp.eq.s32.totalorder %s16, 3
      %p149 = por %p147, %p148
      %p150 = scmp.ne.s32.totalorder %s142, %s145
      %p151 = scmp.eq.s32.totalorder %s16, 0
      %p152 = por %p150, %p151
      %p153 = scmp.ne.s32.totalorder %s142, %s145
      %p154 = scmp.eq.s32.totalorder %s21, 3
      %p155 = por %p153, %p154
      %p156 = scmp.ne.s32.totalorder %s145, %s146
      %p157 = scmp.eq.s32.totalorder %s21, 0
      %p158 = por %p156, %p157
      %p159 = scmp.ne.s32.totalorder %s145, %s146
      %p160 = scmp.eq.s32.totalorder %s22, 3
      %p161 = por %p159, %p160
      %p163 = scmp.ne.s32.totalorder %s146, %s162
      %p164 = scmp.eq.s32.totalorder %s22, 0
      %p165 = por %p163, %p164
      %p166 = scmp.le.s32.totalorder 1, %s16
      %p167 = scmp.lt.s32.totalorder %s16, 5
      %p168 = pnand %p166, %p167
      %p169 = pneg %p168
      // Predicated region
      $region9: #{_expert_forward_impl.1} parent=5 // pred_check
        _
      $region10: #{_expert_forward_impl.1} parent=5 // pred_check_branch
        %171 = sbr.rel (%p168) target = $region12
      $region11: #{_expert_forward_impl.1} parent=5 // pred_region
        %s172 = ssub.s32 %s16, 1
      $region12: #{_expert_forward_impl.1} parent=5 // pred_fallthru
        _
      %p173 = scmp.lt.s32.totalorder %s16, 4
      // Predicated region
      $region13: #{_expert_forward_impl.1} parent=5 // pred_check
        %p174 = pneg %p173
      $region14: #{_expert_forward_impl.1} parent=5 // pred_check_branch
        %176 = sbr.rel (%p174) target = $region16
      $region15: #{_expert_forward_impl.1} parent=5 // pred_region
        // Predicated region
        $region17: #{_expert_forward_impl.1} parent=15 // pred_check
          %p177 = pneg %p48
        $region18: #{_expert_forward_impl.1} parent=15 // pred_check_branch
          %179 = sbr.rel (%p177) target = $region20
        $region19: #{_expert_forward_impl.1} parent=15 // pred_region
          %s180 = smul.u32 4, %s23
          %p181 = scmp.lt.s32.totalorder %s180, 7
          %s182 = scalar_select %p181, %s180, 7
          %s183 = smul.addr %s182, 4
          %s184 = scalar_lea.vmem %s0, %s183
          %s185 = smul.u32 4, %s23
        $region20: #{_expert_forward_impl.1} parent=15 // pred_fallthru
          _
        // Predicated region
        $region21: #{_expert_forward_impl.1} parent=15 // pred_check
          %p186 = pneg %p74
        $region22: #{_expert_forward_impl.1} parent=15 // pred_check_branch
          %188 = sbr.rel (%p186) target = $region24
        $region23: #{_expert_forward_impl.1} parent=15 // pred_region
          %s189 = sand.u32 %s64, 1
          %s190 = scalar_lea.sflag [#allocation4], %s189
          %s191 = sand.u32 %s64, 1
          %s192 = smul.addr %s191, 32
          %s193 = scalar_lea.vmem [#allocation3], %s192
          %s195 = ssub.s32 512, 512
          %196 = vsyncadd %s190, %s195
          %s197 = smul.addr %s24, 64
          %s198 = scalar_lea.hbm %s1, %s197
          %s199 = sshll.u32 %s193, 4
          %s200 = int_to_ptr.vmem [resolvable:$true] %s199
          %205 = dma.hbm_to_vmem [thread:$0]  %s198, 512, %s200, %s190, 128, 64, 4
        $region24: #{_expert_forward_impl.1} parent=15 // pred_fallthru
          _
        // Predicated region
        $region25: #{_expert_forward_impl.1} parent=15 // pred_check
          %p206 = pneg %p100
        $region26: #{_expert_forward_impl.1} parent=15 // pred_check_branch
          %208 = sbr.rel (%p206) target = $region28
        $region27: #{_expert_forward_impl.1} parent=15 // pred_region
          %s209 = smul.u32 16, %s24
          %p210 = scmp.lt.s32.totalorder %s209, 31
          %s211 = scalar_select %p210, %s209, 31
          %s212 = smul.addr %s211, 4
          %s213 = scalar_lea.vmem %s2, %s212
          %s214 = smul.u32 16, %s24
        $region28: #{_expert_forward_impl.1} parent=15 // pred_fallthru
          _
        // Predicated region
        $region29: #{_expert_forward_impl.1} parent=15 // pred_check
          %p215 = pneg %p126
        $region30: #{_expert_forward_impl.1} parent=15 // pred_check_branch
          %217 = sbr.rel (%p215) target = $region32
        $region31: #{_expert_forward_impl.1} parent=15 // pred_region
          %s218 = sand.u32 %s116, 1
          %s219 = scalar_lea.sflag [#allocation6], %s218
          %s220 = sand.u32 %s116, 1
          %s221 = smul.addr %s220, 32
          %s222 = scalar_lea.vmem [#allocation5], %s221
          %s224 = ssub.s32 512, 512
          %225 = vsyncadd %s219, %s224
          %s226 = smul.addr %s24, 64
          %s227 = scalar_lea.hbm %s3, %s226
          %s228 = sshll.u32 %s222, 4
          %s229 = int_to_ptr.vmem [resolvable:$true] %s228
          %234 = dma.hbm_to_vmem [thread:$0]  %s227, 512, %s229, %s219, 128, 64, 4
        $region32: #{_expert_forward_impl.1} parent=15 // pred_fallthru
          _
      $region16: #{_expert_forward_impl.1} parent=5 // pred_fallthru
        _
      %p235 = scmp.le.s32.totalorder 1, %s16
      %p236 = scmp.lt.s32.totalorder %s16, 5
      %p237 = pnand %p235, %p236
      %p238 = pneg %p237
      // Predicated region
      $region33: #{_expert_forward_impl.1} parent=5 // pred_check
        _
      $region34: #{_expert_forward_impl.1} parent=5 // pred_check_branch
        %240 = sbr.rel (%p237) target = $region36
      $region35: #{_expert_forward_impl.1} parent=5 // pred_region
        %s241 = ssub.s32 %s16, 1
        %s242 = sand.u32 %s67, 1
        %s243 = scalar_lea.sflag [#allocation4], %s242
        %s244 = sand.u32 %s67, 1
        %s245 = smul.addr %s244, 32
        %s246 = scalar_lea.vmem [#allocation3], %s245
        // Predicated region
        $region37: #{_expert_forward_impl.1} parent=35 // pred_check
          %p247 = pneg %p80
        $region38: #{_expert_forward_impl.1} parent=35 // pred_check_branch
          %249 = sbr.rel (%p247) target = $region40
        $region39: #{_expert_forward_impl.1} parent=35 // pred_region
          %250 = dma.done %s243, 512
        $region40: #{_expert_forward_impl.1} parent=35 // pred_fallthru
          _
        %s251 = sand.u32 %s119, 1
        %s252 = scalar_lea.sflag [#allocation6], %s251
        %s253 = sand.u32 %s119, 1
        %s254 = smul.addr %s253, 32
        %s255 = scalar_lea.vmem [#allocation5], %s254
        // Predicated region
        $region41: #{_expert_forward_impl.1} parent=35 // pred_check
          %p256 = pneg %p132
        $region42: #{_expert_forward_impl.1} parent=35 // pred_check_branch
          %258 = sbr.rel (%p256) target = $region44
        $region43: #{_expert_forward_impl.1} parent=35 // pred_region
          %259 = dma.done %s252, 512
        $region44: #{_expert_forward_impl.1} parent=35 // pred_fallthru
          _
        %s260 = smul.u32 4, %s25
        %p261 = scmp.lt.s32.totalorder %s260, 7
        %s262 = scalar_select %p261, %s260, 7
        %s263 = smul.addr %s262, 4
        %s264 = scalar_lea.vmem %s0, %s263
        %p265 = pneg %p54
        %p266 = pneg %p51
        %s267 = sand.u32 %s67, 1
        %s268 = scalar_lea.sflag [#allocation4], %s267
        %s269 = sand.u32 %s67, 1
        %s270 = smul.addr %s269, 32
        %s271 = scalar_lea.vmem [#allocation3], %s270
        %p272 = pneg %p80
        %p273 = pneg %p77
        %s274 = smul.u32 16, %s26
        %p275 = scmp.lt.s32.totalorder %s274, 31
        %s276 = scalar_select %p275, %s274, 31
        %s277 = smul.addr %s276, 4
        %s278 = scalar_lea.vmem %s2, %s277
        %p279 = pneg %p106
        %p280 = pneg %p103
        %s281 = sand.u32 %s119, 1
        %s282 = scalar_lea.sflag [#allocation6], %s281
        %s283 = sand.u32 %s119, 1
        %s284 = smul.addr %s283, 32
        %s285 = scalar_lea.vmem [#allocation5], %s284
        %p286 = pneg %p132
        %p287 = pneg %p129
        %p288 = pneg %p158
        %p289 = pneg %p155
        %s290 = smul.u32 4, %s25
        %p291 = scmp.lt.s32.totalorder %s290, 7
        %s292 = scalar_select %p291, %s290, 7
        %s293 = smul.addr %s292, 8
        %s294 = scalar_lea.vmem %s4, %s293
        %s295 = smul.u32 4, %s25
        %p296 = scmp.lt.s32.totalorder %s295, 7
        %s297 = scalar_select %p296, %s295, 7
        %s298 = smul.addr %s297, 4
        %s299 = scalar_lea.vmem %s0, %s298
        %s300 = smul.u32 4, %s25
        %s301 = smul.u32 16, %s26
        %p302 = scmp.lt.s32.totalorder %s301, 31
        %s303 = scalar_select %p302, %s301, 31
        %s304 = smul.addr %s303, 4
        %s305 = scalar_lea.vmem %s2, %s304
        %s306 = smul.u32 16, %s26
        %s307 = smul.u32 4, %s25
        %p308 = scmp.lt.s32.totalorder %s307, 7
        %s309 = scalar_select %p308, %s307, 7
        %s310 = smul.addr %s309, 8
        %s311 = scalar_lea.vmem %s4, %s310
        %s312 = smul.u32 4, %s25
        %p314 = scmp.eq.s32.totalorder %s26, 0
        // Predicated region
        $region45: #{_expert_forward_impl.1} parent=35 // pred_check
          %p315 = pneg %p314
        $region46: #{_expert_forward_impl.1} parent=35 // pred_check_branch
          %317 = sbr.rel (%p315) target = $region48
        $region47: #{_expert_forward_impl.1} parent=35 // pred_region
          %318 = vst [vmem:[#allocation2] sm:$0xff] 0.0
          %319 = vst [vmem:[#allocation2 + $0x8] sm:$0xff] 0.0
          %320 = vst [vmem:[#allocation2 + $0x10] sm:$0xff] 0.0
          %321 = vst [vmem:[#allocation2 + $0x18] sm:$0xff] 0.0
        $region48: #{_expert_forward_impl.1} parent=35 // pred_fallthru
          _
        %v322 = vld [vmem:[%s299] sm:$0xf]
        %v323 = vld [vmem:[%s299 + $0x4] sm:$0xf]
        %v324 = vld [vmem:[%s299 + $0x8] sm:$0xf]
        %v325 = vld [vmem:[%s299 + $0xc] sm:$0xf]
        %v326 = vld [vmem:[%s246] sm:$0xf]
        %v327 = vld [vmem:[%s246 + $0x4] sm:$0xf]
        %v328 = vld [vmem:[%s246 + $0x8] sm:$0xf]
        %v329 = vld [vmem:[%s246 + $0xc] sm:$0xf]
        %v330 = vld [vmem:[%s246 + $0x10] sm:$0xf]
        %v331 = vld [vmem:[%s246 + $0x14] sm:$0xf]
        %v332 = vld [vmem:[%s246 + $0x18] sm:$0xf]
        %v333 = vld [vmem:[%s246 + $0x1c] sm:$0xf]
        %v338 = vunpack.c.l.b16 %v322
        %v339 = vunpack.c.l.b16 %v323
        %v340 = vunpack.c.l.b16 %v324
        %v341 = vunpack.c.l.b16 %v325
        %v342 = vpack.c.b16 %v339, %v338
        %v343 = vpack.c.b16 %v341, %v340
        %v352 = vunpack.c.l.b16 %v326
        %v353 = vunpack.c.l.b16 %v327
        %v354 = vunpack.c.l.b16 %v328
        %v355 = vunpack.c.l.b16 %v329
        %v356 = vunpack.c.l.b16 %v330
        %v357 = vunpack.c.l.b16 %v331
        %v358 = vunpack.c.l.b16 %v332
        %v359 = vunpack.c.l.b16 %v333
        %v360 = vpack.c.b16 %v353, %v352
        %v361 = vpack.c.b16 %v355, %v354
        %v362 = vpack.c.b16 %v357, %v356
        %v363 = vpack.c.b16 %v359, %v358
        %vm368 = vcmask 523264
        %v370 = vsel %vm368, %v342, 0
        %v373 = vsel %vm368, %v343, 0
        %375 = vmatprep.subr.bf16.mxu0 0
        %376 = vmatpush1.bf16.msra.mxu0 0
        %377 = vmatprep.subr.bf16.mxu0 0
        %378 = vmatpush1.bf16.msra.mxu0 0
        %379 = vmatprep.subr.bf16.mxu0 0
        %380 = vmatpush1.bf16.msra.mxu0 0
        %381 = vmatprep.subr.bf16.mxu0 0
        %382 = vmatpush1.bf16.msra.mxu0 0
        %383 = vmatprep.subr.bf16.mxu0 0
        %384 = vmatpush1.bf16.msra.mxu0 %v363
        %385 = vmatprep.subr.bf16.mxu0 0
        %386 = vmatpush1.bf16.msra.mxu0 %v362
        %387 = vmatprep.subr.bf16.mxu0 0
        %388 = vmatpush1.bf16.msra.mxu0 %v361
        %389 = vmatprep.subr.bf16.mxu0 0
        %390 = vmatpush1.bf16.msra.mxu0 %v360
        %391 = vmatprep.subr.bf16.mxu0 0
        %392 = vmatpush2.bf16.msra.mxu0 0
        %393 = vmatprep.subr.bf16.mxu0 0
        %394 = vmatpush2.bf16.msra.mxu0 0
        %395 = vmatprep.subr.bf16.mxu0 0
        %396 = vmatpush2.bf16.msra.mxu0 0
        %397 = vmatprep.subr.bf16.mxu0 0
        %398 = vmatpush2.bf16.msra.mxu0 0
        %399 = vmatprep.subr.bf16.mxu0 0
        %400 = vmatpush2.bf16.msra.mxu0 0
        %401 = vmatprep.subr.bf16.mxu0 0
        %402 = vmatpush2.bf16.msra.mxu0 0
        %403 = vmatprep.subr.bf16.mxu0 0
        %404 = vmatpush2.bf16.msra.mxu0 0
        %405 = vmatprep.subr.bf16.mxu0 0
        %406 = vmatpush2.bf16.msra.mxu0 0
        %407 = vmatprep.mubr.bf16.mxu0 0
        %408 = vmatmul.mubr.bf16.gmra.mxu0 %v370
        %v409 = vpop.f32.mrf.mxu0
        %v410 = vadd.f32 0.0, %v409
        %v411 = vpop.f32.mrf.mxu0
        %v412 = vpop.f32.mrf.mxu0
        %v413 = vadd.f32 0.0, %v412
        %v414 = vpop.f32.mrf.mxu0
        %415 = vmatprep.mubr.bf16.mxu0 0
        %416 = vmatmul.mubr.bf16.gmra.mxu0 %v373
        %v417 = vpop.f32.mrf.mxu0
        %v418 = vadd.f32 0.0, %v417
        %v419 = vpop.f32.mrf.mxu0
        %v420 = vpop.f32.mrf.mxu0
        %v421 = vadd.f32 0.0, %v420
        %v422 = vpop.f32.mrf.mxu0
        %423 = vdwg.mxu0
        %v424 = vld [vmem:[%s255] sm:$0xf]
        %v425 = vld [vmem:[%s255 + $0x4] sm:$0xf]
        %v426 = vld [vmem:[%s255 + $0x8] sm:$0xf]
        %v427 = vld [vmem:[%s255 + $0xc] sm:$0xf]
        %v428 = vld [vmem:[%s255 + $0x10] sm:$0xf]
        %v429 = vld [vmem:[%s255 + $0x14] sm:$0xf]
        %v430 = vld [vmem:[%s255 + $0x18] sm:$0xf]
        %v431 = vld [vmem:[%s255 + $0x1c] sm:$0xf]
        %v440 = vunpack.c.l.b16 %v424
        %v441 = vunpack.c.l.b16 %v425
        %v442 = vunpack.c.l.b16 %v426
        %v443 = vunpack.c.l.b16 %v427
        %v444 = vunpack.c.l.b16 %v428
        %v445 = vunpack.c.l.b16 %v429
        %v446 = vunpack.c.l.b16 %v430
        %v447 = vunpack.c.l.b16 %v431
        %v448 = vpack.c.b16 %v441, %v440
        %v449 = vpack.c.b16 %v443, %v442
        %v450 = vpack.c.b16 %v445, %v444
        %v451 = vpack.c.b16 %v447, %v446
        %456 = vmatprep.subr.bf16.mxu0 0
        %457 = vmatpush1.bf16.msra.mxu0 0
        %458 = vmatprep.subr.bf16.mxu0 0
        %459 = vmatpush1.bf16.msra.mxu0 0
        %460 = vmatprep.subr.bf16.mxu0 0
        %461 = vmatpush1.bf16.msra.mxu0 0
        %462 = vmatprep.subr.bf16.mxu0 0
        %463 = vmatpush1.bf16.msra.mxu0 0
        %464 = vmatprep.subr.bf16.mxu0 0
        %465 = vmatpush1.bf16.msra.mxu0 %v451
        %466 = vmatprep.subr.bf16.mxu0 0
        %467 = vmatpush1.bf16.msra.mxu0 %v450
        %468 = vmatprep.subr.bf16.mxu0 0
        %469 = vmatpush1.bf16.msra.mxu0 %v449
        %470 = vmatprep.subr.bf16.mxu0 0
        %471 = vmatpush1.bf16.msra.mxu0 %v448
        %472 = vmatprep.subr.bf16.mxu0 0
        %473 = vmatpush2.bf16.msra.mxu0 0
        %474 = vmatprep.subr.bf16.mxu0 0
        %475 = vmatpush2.bf16.msra.mxu0 0
        %476 = vmatprep.subr.bf16.mxu0 0
        %477 = vmatpush2.bf16.msra.mxu0 0
        %478 = vmatprep.subr.bf16.mxu0 0
        %479 = vmatpush2.bf16.msra.mxu0 0
        %480 = vmatprep.subr.bf16.mxu0 0
        %481 = vmatpush2.bf16.msra.mxu0 0
        %482 = vmatprep.subr.bf16.mxu0 0
        %483 = vmatpush2.bf16.msra.mxu0 0
        %484 = vmatprep.subr.bf16.mxu0 0
        %485 = vmatpush2.bf16.msra.mxu0 0
        %486 = vmatprep.subr.bf16.mxu0 0
        %487 = vmatpush2.bf16.msra.mxu0 0
        %488 = vmatprep.mubr.bf16.mxu0 0
        %489 = vmatmul.mubr.bf16.gmra.mxu0 %v370
        %v490 = vpop.f32.mrf.mxu0
        %v491 = vadd.f32 0.0, %v490
        %v492 = vpop.f32.mrf.mxu0
        %v493 = vpop.f32.mrf.mxu0
        %v494 = vadd.f32 0.0, %v493
        %v495 = vpop.f32.mrf.mxu0
        %496 = vmatprep.mubr.bf16.mxu0 0
        %497 = vmatmul.mubr.bf16.gmra.mxu0 %v373
        %v498 = vpop.f32.mrf.mxu0
        %v499 = vadd.f32 0.0, %v498
        %v500 = vpop.f32.mrf.mxu0
        %v501 = vpop.f32.mrf.mxu0
        %v502 = vadd.f32 0.0, %v501
        %v503 = vpop.f32.mrf.mxu0
        %504 = vdwg.mxu0
        %v505 = vxor.u32 %v410, 2147483648
        %v506 = vxor.u32 %v413, 2147483648
        %v507 = vxor.u32 %v418, 2147483648
        %v508 = vxor.u32 %v421, 2147483648
        %v509 = vmul.f32 %v505, 1.442695
        %v510 = vpow.pop %v509
        %v511 = vmul.f32 %v506, 1.442695
        %v512 = vpow.pop %v511
        %v513 = vmul.f32 %v507, 1.442695
        %v514 = vpow.pop %v513
        %v515 = vmul.f32 %v508, 1.442695
        %v516 = vpow.pop %v515
        %v517 = vadd.f32 %v510, 1.0
        %v518 = vadd.f32 %v512, 1.0
        %v519 = vadd.f32 %v514, 1.0
        %v520 = vadd.f32 %v516, 1.0
        %v521 = vrcp.pop %v517
        %v522 = vmul.f32 1.0, %v521
        %v523 = vrcp.pop %v518
        %v524 = vmul.f32 1.0, %v523
        %v525 = vrcp.pop %v519
        %v526 = vmul.f32 1.0, %v525
        %v527 = vrcp.pop %v520
        %v528 = vmul.f32 1.0, %v527
        %v529 = vmul.f32 %v410, %v522
        %v530 = vmul.f32 %v413, %v524
        %v531 = vmul.f32 %v418, %v526
        %v532 = vmul.f32 %v421, %v528
        %v533 = vmul.f32 %v529, %v491
        %v534 = vmul.f32 %v530, %v494
        %v535 = vmul.f32 %v531, %v499
        %v536 = vmul.f32 %v532, %v502
        %v537 = vld [vmem:[#allocation2] sm:$0xff]
        %v538 = vld [vmem:[#allocation2 + $0x8] sm:$0xff]
        %v539 = vld [vmem:[#allocation2 + $0x10] sm:$0xff]
        %v540 = vld [vmem:[#allocation2 + $0x18] sm:$0xff]
        %v541 = vpack.c.bf16 %v534, %v533
        %v542 = vpack.c.bf16 %v536, %v535
        %v543 = vld [vmem:[%s305] sm:$0xf]
        %v544 = vld [vmem:[%s305 + $0x4] sm:$0xf]
        %v545 = vld [vmem:[%s305 + $0x8] sm:$0xf]
        %v546 = vld [vmem:[%s305 + $0xc] sm:$0xf]
        %v547 = vld [vmem:[%s305 + $0x10] sm:$0xf]
        %v548 = vld [vmem:[%s305 + $0x14] sm:$0xf]
        %v549 = vld [vmem:[%s305 + $0x18] sm:$0xf]
        %v550 = vld [vmem:[%s305 + $0x1c] sm:$0xf]
        %v551 = vld [vmem:[%s305 + $0x20] sm:$0xf]
        %v552 = vld [vmem:[%s305 + $0x24] sm:$0xf]
        %v553 = vld [vmem:[%s305 + $0x28] sm:$0xf]
        %v554 = vld [vmem:[%s305 + $0x2c] sm:$0xf]
        %v555 = vld [vmem:[%s305 + $0x30] sm:$0xf]
        %v556 = vld [vmem:[%s305 + $0x34] sm:$0xf]
        %v557 = vld [vmem:[%s305 + $0x38] sm:$0xf]
        %v558 = vld [vmem:[%s305 + $0x3c] sm:$0xf]
        %v575 = vunpack.c.l.b16 %v543
        %v576 = vunpack.c.l.b16 %v544
        %v577 = vunpack.c.l.b16 %v545
        %v578 = vunpack.c.l.b16 %v546
        %v579 = vunpack.c.l.b16 %v547
        %v580 = vunpack.c.l.b16 %v548
        %v581 = vunpack.c.l.b16 %v549
        %v582 = vunpack.c.l.b16 %v550
        %v583 = vunpack.c.l.b16 %v551
        %v584 = vunpack.c.l.b16 %v552
        %v585 = vunpack.c.l.b16 %v553
        %v586 = vunpack.c.l.b16 %v554
        %v587 = vunpack.c.l.b16 %v555
        %v588 = vunpack.c.l.b16 %v556
        %v589 = vunpack.c.l.b16 %v557
        %v590 = vunpack.c.l.b16 %v558
        %v591 = vpack.c.b16 %v576, %v575
        %v592 = vpack.c.b16 %v578, %v577
        %v593 = vpack.c.b16 %v580, %v579
        %v594 = vpack.c.b16 %v582, %v581
        %v595 = vpack.c.b16 %v584, %v583
        %v596 = vpack.c.b16 %v586, %v585
        %v597 = vpack.c.b16 %v588, %v587
        %v598 = vpack.c.b16 %v590, %v589
        %607 = vmatprep.subr.bf16.mxu0 0
        %608 = vmatpush1.bf16.msra.mxu0 %v598
        %609 = vmatprep.subr.bf16.mxu0 0
        %610 = vmatpush1.bf16.msra.mxu0 %v597
        %611 = vmatprep.subr.bf16.mxu0 0
        %612 = vmatpush1.bf16.msra.mxu0 %v596
        %613 = vmatprep.subr.bf16.mxu0 0
        %614 = vmatpush1.bf16.msra.mxu0 %v595
        %615 = vmatprep.subr.bf16.mxu0 0
        %616 = vmatpush1.bf16.msra.mxu0 %v594
        %617 = vmatprep.subr.bf16.mxu0 0
        %618 = vmatpush1.bf16.msra.mxu0 %v593
        %619 = vmatprep.subr.bf16.mxu0 0
        %620 = vmatpush1.bf16.msra.mxu0 %v592
        %621 = vmatprep.subr.bf16.mxu0 0
        %622 = vmatpush1.bf16.msra.mxu0 %v591
        %623 = vmatprep.subr.bf16.mxu0 0
        %624 = vmatpush2.bf16.msra.mxu0 0
        %625 = vmatprep.subr.bf16.mxu0 0
        %626 = vmatpush2.bf16.msra.mxu0 0
        %627 = vmatprep.subr.bf16.mxu0 0
        %628 = vmatpush2.bf16.msra.mxu0 0
        %629 = vmatprep.subr.bf16.mxu0 0
        %630 = vmatpush2.bf16.msra.mxu0 0
        %631 = vmatprep.subr.bf16.mxu0 0
        %632 = vmatpush2.bf16.msra.mxu0 0
        %633 = vmatprep.subr.bf16.mxu0 0
        %634 = vmatpush2.bf16.msra.mxu0 0
        %635 = vmatprep.subr.bf16.mxu0 0
        %636 = vmatpush2.bf16.msra.mxu0 0
        %637 = vmatprep.subr.bf16.mxu0 0
        %638 = vmatpush2.bf16.msra.mxu0 0
        %639 = vmatprep.mubr.bf16.mxu0 0
        %640 = vmatmul.mubr.bf16.gmra.mxu0 %v541
        %v641 = vpop.f32.mrf.mxu0
        %v642 = vadd.f32 0.0, %v641
        %v643 = vpop.f32.mrf.mxu0
        %v644 = vpop.f32.mrf.mxu0
        %v645 = vadd.f32 0.0, %v644
        %v646 = vpop.f32.mrf.mxu0
        %647 = vmatprep.mubr.bf16.mxu0 0
        %648 = vmatmul.mubr.bf16.gmra.mxu0 %v542
        %v649 = vpop.f32.mrf.mxu0
        %v650 = vadd.f32 0.0, %v649
        %v651 = vpop.f32.mrf.mxu0
        %v652 = vpop.f32.mrf.mxu0
        %v653 = vadd.f32 0.0, %v652
        %v654 = vpop.f32.mrf.mxu0
        %655 = vdwg.mxu0
        %v656 = vadd.f32 %v537, %v642
        %v657 = vadd.f32 %v538, %v645
        %v658 = vadd.f32 %v539, %v650
        %v659 = vadd.f32 %v540, %v653
        %660 = vst [vmem:[#allocation2] sm:$0xff] %v656
        %661 = vst [vmem:[#allocation2 + $0x8] sm:$0xff] %v657
        %662 = vst [vmem:[#allocation2 + $0x10] sm:$0xff] %v658
        %663 = vst [vmem:[#allocation2 + $0x18] sm:$0xff] %v659
        %p664 = scmp.eq.s32.totalorder %s26, 1
        // Predicated region
        $region49: #{_expert_forward_impl.1} parent=35 // pred_check
          %p665 = pneg %p664
        $region50: #{_expert_forward_impl.1} parent=35 // pred_check_branch
          %667 = sbr.rel (%p665) target = $region52
        $region51: #{_expert_forward_impl.1} parent=35 // pred_region
          %v668 = vld [vmem:[#allocation2] sm:$0xff]
          %v669 = vld [vmem:[#allocation2 + $0x8] sm:$0xff]
          %v670 = vld [vmem:[#allocation2 + $0x10] sm:$0xff]
          %v671 = vld [vmem:[#allocation2 + $0x18] sm:$0xff]
          %v672 = vxor.u32 %v668, 2147483648
          %v673 = vxor.u32 %v669, 2147483648
          %v674 = vxor.u32 %v670, 2147483648
          %v675 = vxor.u32 %v671, 2147483648
          %v676 = vmul.f32 %v672, 1.442695
          %v677 = vpow.pop %v676
          %v678 = vmul.f32 %v673, 1.442695
          %v679 = vpow.pop %v678
          %v680 = vmul.f32 %v674, 1.442695
          %v681 = vpow.pop %v680
          %v682 = vmul.f32 %v675, 1.442695
          %v683 = vpow.pop %v682
          %v684 = vadd.f32 %v677, 1.0
          %v685 = vadd.f32 %v679, 1.0
          %v686 = vadd.f32 %v681, 1.0
          %v687 = vadd.f32 %v683, 1.0
          %v688 = vrcp.pop %v684
          %v689 = vmul.f32 1.0, %v688
          %v690 = vrcp.pop %v685
          %v691 = vmul.f32 1.0, %v690
          %v692 = vrcp.pop %v686
          %v693 = vmul.f32 1.0, %v692
          %v694 = vrcp.pop %v687
          %v695 = vmul.f32 1.0, %v694
          %v696 = vmul.f32 %v668, %v689
          %v697 = vmul.f32 %v669, %v691
          %v698 = vmul.f32 %v670, %v693
          %v699 = vmul.f32 %v671, %v695
          %700 = vst [vmem:[%s311] sm:$0xff] %v696
          %701 = vst [vmem:[%s311 + $0x8] sm:$0xff] %v697
          %702 = vst [vmem:[%s311 + $0x10] sm:$0xff] %v698
          %703 = vst [vmem:[%s311 + $0x18] sm:$0xff] %v699
        $region52: #{_expert_forward_impl.1} parent=35 // pred_fallthru
          _
        %s704 = smul.u32 4, %s25
        %p705 = scmp.lt.s32.totalorder %s704, 7
        %s706 = scalar_select %p705, %s704, 7
        %s707 = smul.addr %s706, 8
        %s708 = scalar_lea.vmem %s4, %s707
        // Predicated region
        $region53: #{_expert_forward_impl.1} parent=35 // pred_check
          %p709 = pneg %p155
        $region54: #{_expert_forward_impl.1} parent=35 // pred_check_branch
          %711 = sbr.rel (%p709) target = $region56
        $region55: #{_expert_forward_impl.1} parent=35 // pred_region
          %s712 = smul.u32 4, %s25
        $region56: #{_expert_forward_impl.1} parent=35 // pred_fallthru
          _
      $region36: #{_expert_forward_impl.1} parent=5 // pred_fallthru
        _
      %p713 = scmp.le.s32.totalorder 2, %s16
      // Predicated region
      $region57: #{_expert_forward_impl.1} parent=5 // pred_check
        %p714 = pneg %p713
      $region58: #{_expert_forward_impl.1} parent=5 // pred_check_branch
        %716 = sbr.rel (%p714) target = $region60
      $region59: #{_expert_forward_impl.1} parent=5 // pred_region
        %s717 = ssub.s32 %s16, 2
        // Predicated region
        $region61: #{_expert_forward_impl.1} parent=59 // pred_check
          %p718 = pneg %p161
        $region62: #{_expert_forward_impl.1} parent=59 // pred_check_branch
          %720 = sbr.rel (%p718) target = $region64
        $region63: #{_expert_forward_impl.1} parent=59 // pred_region
          %s721 = smul.u32 4, %s27
          %p722 = scmp.lt.s32.totalorder %s721, 7
          %s723 = scalar_select %p722, %s721, 7
          %s724 = smul.addr %s723, 8
          %s725 = scalar_lea.vmem %s4, %s724
        $region64: #{_expert_forward_impl.1} parent=59 // pred_fallthru
          _
      $region60: #{_expert_forward_impl.1} parent=5 // pred_fallthru
        _
    $region6: #{_expert_forward_impl.1} parent=1 // loop_footer
      %s20 = sadd.s32 1, %s16
    $region7: #{_expert_forward_impl.1} parent=1 // loop_footer_branch
      %15 = sbr.rel target = $region3
    $region8: #{_expert_forward_impl.1} parent=1 // loop_exit
      _
    %726 = vsyncpa [#allocation4], 1
    %s727 = scalar_lea.sflag [#allocation4], 1
    %728 = vsyncpa %s727, 1
    %729 = vsyncpa [#allocation6], 1
    %s730 = scalar_lea.sflag [#allocation6], 1
    %731 = vsyncpa %s730, 1

</llo_original>
